<compile_context>
chip_gen: v6e
topology: v6e:2x2x1
jax: 0.10.0
libtpu: 0.0.40
codegen_flags: <defaults>
</compile_context>

<pallas_src>
import jax
import jax.numpy as jnp
from jax.experimental import pallas as pl
from jax.experimental.pallas import tpu as pltpu


def _conv1x1_sigmoid_kernel(x_ref, w_ref, b_ref, o_ref):
    # x_ref: [N, Cin_pad], w_ref: [Cin_pad, Cout_pad], b_ref: [1, Cout_pad],
    # o_ref: [N, Cout_pad]
    acc = jnp.dot(x_ref[...], w_ref[...], preferred_element_type=jnp.float32)
    acc = acc + b_ref[...]                      # broadcast bias over N
    o_ref[...] = jax.nn.sigmoid(acc).astype(o_ref.dtype)


def pack_conv1x1_params(weight, bias, cin_pad=64, cout_pad=1280):
    """One-time parameter packing (done outside the per-call path).

    weight: [Cout, Cin, 1, 1], bias: [Cout]
    Returns W packed as [cin_pad, cout_pad] (== padded W^T) and bias as
    [1, cout_pad], both zero-padded so tiles are (8,128)-aligned.
    """
    cout, cin = weight.shape[0], weight.shape[1]
    assert cin <= cin_pad and cout <= cout_pad
    w2d = weight.reshape(cout, cin).T                              # [Cin, Cout]
    w_packed = jnp.zeros((cin_pad, cout_pad), weight.dtype)
    w_packed = w_packed.at[:cin, :cout].set(w2d)
    b_packed = jnp.zeros((1, cout_pad), bias.dtype)
    b_packed = b_packed.at[0, :cout].set(bias)
    return w_packed, b_packed


def conv1x1_sigmoid(x_nchw, w_packed, b_packed, cout):
    """x_nchw: [N, Cin, 1, 1]; w_packed: [Cin_pad, Cout_pad]; b_packed: [1, Cout_pad]."""
    n, cin, h, w = x_nchw.shape
    assert h == 1 and w == 1, "1x1 conv on 1x1 spatial only"
    cin_pad, cout_pad = w_packed.shape

    # Pad the tiny activation (N x Cin -> N x Cin_pad) with zeros.
    x2d = x_nchw.reshape(n, cin)
    x_p = jnp.zeros((n, cin_pad), x2d.dtype).at[:, :cin].set(x2d)

    bytes_accessed = 4 * (n * cin_pad + cin_pad * cout_pad + cout_pad + n * cout_pad)
    out = pl.pallas_call(
        _conv1x1_sigmoid_kernel,
        out_shape=jax.ShapeDtypeStruct((n, cout_pad), x_nchw.dtype),
        in_specs=[
            pl.BlockSpec(memory_space=pltpu.MemorySpace.VMEM),
            pl.BlockSpec(memory_space=pltpu.MemorySpace.VMEM),
            pl.BlockSpec(memory_space=pltpu.MemorySpace.VMEM),
        ],
        out_specs=pl.BlockSpec(memory_space=pltpu.MemorySpace.VMEM),
        cost_estimate=pl.CostEstimate(
            flops=2 * n * cin_pad * cout_pad,
            transcendentals=n * cout_pad,
            bytes_accessed=bytes_accessed,
        ),
    )(x_p, w_packed, b_packed)

    # Slice off the lane padding and restore NCHW.
    return out[:, :cout].reshape(n, cout, 1, 1)


if __name__ == "__main__":
    key = jax.random.PRNGKey(0)
    k_x, k_w, k_b = jax.random.split(key, 3)

    N, CIN, COUT = 1, 50, 1200

    # Deterministic synthetic parameters with the module's shapes.
    x = jax.random.normal(k_x, (N, CIN, 1, 1), dtype=jnp.float32)
    weight = jax.random.normal(k_w, (COUT, CIN, 1, 1), dtype=jnp.float32) * 0.05
    bias = jax.random.normal(k_b, (COUT,), dtype=jnp.float32) * 0.05

    # One-time parameter packing (transpose + pad hoisted out of the call path).
    w_packed, b_packed = pack_conv1x1_params(weight, bias)
    w_packed, b_packed = jax.block_until_ready((w_packed, b_packed))

    y = conv1x1_sigmoid(x, w_packed, b_packed, COUT)
    y = jax.block_until_ready(y)

    # Reference check in plain JAX.
    ref = jax.nn.sigmoid(
        jnp.einsum("nc,oc->no", x.reshape(N, CIN), weight.reshape(COUT, CIN))
        + bias[None, :]
    ).reshape(N, COUT, 1, 1)
    assert y.shape == (N, COUT, 1, 1)
    assert jnp.allclose(y, ref, atol=1e-5, rtol=1e-5)

    print("KERNEL_OK")
</pallas_src>

<mosaic_0001>
module attributes {stable_mosaic.version = 11 : i64} {
  func.func @_conv1x1_sigmoid_kernel(%arg0: memref<1x64xf32, #tpu.memory_space<vmem>>, %arg1: memref<64x1280xf32, #tpu.memory_space<vmem>>, %arg2: memref<1x1280xf32, #tpu.memory_space<vmem>>, %arg3: memref<1x1280xf32, #tpu.memory_space<vmem>>) attributes {dimension_semantics = [], scalar_prefetch = 0 : i64, scratch_operands = 0 : i64, tpu.core_type = #tpu.core_type<tc>} {
    %c0 = arith.constant 0 : index
    %c0_0 = arith.constant 0 : index
    %0 = vector.load %arg0[%c0, %c0_0] : memref<1x64xf32, #tpu.memory_space<vmem>>, vector<1x64xf32>
    %c0_1 = arith.constant 0 : index
    %c0_2 = arith.constant 0 : index
    %1 = vector.load %arg1[%c0_1, %c0_2] : memref<64x1280xf32, #tpu.memory_space<vmem>>, vector<64x1280xf32>
    %cst = arith.constant dense<0.000000e+00> : vector<1x1280xf32>
    %2 = tpu.matmul %0, %1, %cst {dimension_numbers = #tpu.dot_dimension_numbers<[1], [0], [0], [1], [0, 0, 1, 1], [], []>} : vector<1x64xf32>, vector<64x1280xf32>, vector<1x1280xf32> -> vector<1x1280xf32>
    %c0_3 = arith.constant 0 : index
    %c0_4 = arith.constant 0 : index
    %3 = vector.load %arg2[%c0_3, %c0_4] : memref<1x1280xf32, #tpu.memory_space<vmem>>, vector<1x1280xf32>
    %4 = arith.addf %2, %3 : vector<1x1280xf32>
    %5 = arith.negf %4 : vector<1x1280xf32>
    %6 = math.exp %5 : vector<1x1280xf32>
    %cst_5 = arith.constant 1.000000e+00 : f32
    %7 = vector.broadcast %cst_5 : f32 to vector<1x1280xf32>
    %8 = arith.addf %7, %6 : vector<1x1280xf32>
    %9 = arith.divf %7, %8 : vector<1x1280xf32>
    %c0_6 = arith.constant 0 : index
    %c0_7 = arith.constant 0 : index
    %10 = vector.load %arg3[%c0_6, %c0_7] : memref<1x1280xf32, #tpu.memory_space<vmem>>, vector<1x1280xf32>
    tpu.vector_store %arg3[%c0_6, %c0_7], %9 {strides = array<i32>} : memref<1x1280xf32, #tpu.memory_space<vmem>>, vector<1x1280xf32>,
    return
  }
}

</mosaic_0001>

<llo_original>
// kernel: tpu_custom_call.1
$region0: #{tpu_custom_call.1}
  #allocation0 [shape = 'u32[]', space=smem, size = 0x4, offset = 0x4, fixed_abs, tag = 'smem constant byte address 0x4 - core index']
  #allocation1 [shape = 'u32[144,128]{1,0:T(1,128)}', space=vmem, size = 0x12000, scoped, tag = 'internal scratch']
  %s0 = inlined_call_operand.hbm [shape: f32[1,64], index: 0, kind: input, shape index: {}]
  %s1 = inlined_call_operand.hbm [shape: f32[64,1280], index: 1, kind: input, shape index: {}]
  %s2 = inlined_call_operand.hbm [shape: f32[1,1280], index: 2, kind: input, shape index: {}]
  %s3 = inlined_call_operand.hbm [shape: f32[1,1280], index: 3, kind: output, shape index: {}]
  %s4 = sld [smem:[#allocation0]]
  $region34: #{tpu_custom_call.1} parent=0
    _
  %s6 = ssub.s32 1, %s4
  %s7 = scalar_select 0, %s6, %s4
  $region1: #{tpu_custom_call.1} parent=0
    #allocation2 [shape = 'u8[512]{0}', space=vmem, size = 0x400, scoped, tag = 'input window, operand 0, single buffered']
    #allocation3 [shape = 's32[1]{0}', space=sflag, size = 0x4, scoped, tag = 'scoped memory for tpu_custom_call.1']
    #allocation4 [shape = 's32[1]{0}', space=sflag, size = 0x4, scoped, tag = 'scoped memory for tpu_custom_call.1']
    #allocation5 [shape = 'u8[327680]{0}', space=vmem, size = 0x50000, scoped, tag = 'input window, operand 1, single buffered']
    #allocation6 [shape = 's32[1]{0}', space=sflag, size = 0x4, scoped, tag = 'scoped memory for tpu_custom_call.1']
    #allocation7 [shape = 'u8[5120]{0}', space=vmem, size = 0x1400, scoped, tag = 'input window, operand 2, single buffered']
    #allocation8 [shape = 'u8[5120]{0}', space=vmem, size = 0x1400, scoped, tag = 'output window, operand 0, single buffered']
    %8 = vsyncpa [#allocation3], 0
    %9 = vsyncpa [#allocation6], 0
    %10 = vsyncpa [#allocation4], 0
    // Predicated region
    $region2: #{tpu_custom_call.1} parent=1 // pred_check
      _
    $region3: #{tpu_custom_call.1} parent=1 // pred_check_branch
      %12 = sbr.rel (0) target = $region5
    $region4: #{tpu_custom_call.1} parent=1 // pred_region
      %s14 = ssub.s32 16, 16
      %15 = vsyncadd [#allocation3], %s14
      %s17 = sshll.u32 [#allocation2], 4
      %s18 = int_to_ptr.vmem [resolvable:$true] %s17
      %20 = dma.hbm_to_vmem [thread:$0]  %s0, 16, %s18, [#allocation3]
    $region5: #{tpu_custom_call.1} parent=1 // pred_fallthru
      _
    // Predicated region
    $region6: #{tpu_custom_call.1} parent=1 // pred_check
      _
    $region7: #{tpu_custom_call.1} parent=1 // pred_check_branch
      %22 = sbr.rel (0) target = $region9
    $region8: #{tpu_custom_call.1} parent=1 // pred_region
      %s24 = ssub.s32 10240, 10240
      %25 = vsyncadd [#allocation6], %s24
      %s26 = sshll.u32 [#allocation5], 4
      %s27 = int_to_ptr.vmem [resolvable:$true] %s26
      %32 = dma.hbm_to_vmem [thread:$0]  %s1, 10240, %s27, [#allocation6], 1280, 1280, 80
    $region9: #{tpu_custom_call.1} parent=1 // pred_fallthru
      _
    // Predicated region
    $region10: #{tpu_custom_call.1} parent=1 // pred_check
      _
    $region11: #{tpu_custom_call.1} parent=1 // pred_check_branch
      %34 = sbr.rel (0) target = $region13
    $region12: #{tpu_custom_call.1} parent=1 // pred_region
      %s36 = ssub.s32 160, 160
      %37 = vsyncadd [#allocation6], %s36
      %s39 = sshll.u32 [#allocation7], 4
      %s40 = int_to_ptr.vmem [resolvable:$true] %s39
      %42 = dma.hbm_to_vmem [thread:$0]  %s2, 160, %s40, [#allocation6]
    $region13: #{tpu_custom_call.1} parent=1 // pred_fallthru
      _
    // Predicated region
    $region14: #{tpu_custom_call.1} parent=1 // pred_check
      _
    $region15: #{tpu_custom_call.1} parent=1 // pred_check_branch
      %44 = sbr.rel (0) target = $region17
    $region16: #{tpu_custom_call.1} parent=1 // pred_region
      %45 = dma.done [#allocation3], 16
    $region17: #{tpu_custom_call.1} parent=1 // pred_fallthru
      _
    // Predicated region
    $region18: #{tpu_custom_call.1} parent=1 // pred_check
      _
    $region19: #{tpu_custom_call.1} parent=1 // pred_check_branch
      %47 = sbr.rel (0) target = $region21
    $region20: #{tpu_custom_call.1} parent=1 // pred_region
      %48 = dma.done [#allocation6], 10240
    $region21: #{tpu_custom_call.1} parent=1 // pred_fallthru
      _
    // Predicated region
    $region22: #{tpu_custom_call.1} parent=1 // pred_check
      _
    $region23: #{tpu_custom_call.1} parent=1 // pred_check_branch
      %50 = sbr.rel (0) target = $region25
    $region24: #{tpu_custom_call.1} parent=1 // pred_region
      %51 = dma.done [#allocation6], 160
    $region25: #{tpu_custom_call.1} parent=1 // pred_fallthru
      _
    %v52 = vld [vmem:[#allocation2] sm:$0x1]
    %v53 = vld [vmem:[#allocation5] sm:$0xff]
    %v54 = vld [vmem:[#allocation5 + $0x8] sm:$0xff]
    %v55 = vld [vmem:[#allocation5 + $0x10] sm:$0xff]
    %v56 = vld [vmem:[#allocation5 + $0x18] sm:$0xff]
    %v57 = vld [vmem:[#allocation5 + $0x20] sm:$0xff]
    %v58 = vld [vmem:[#allocation5 + $0x28] sm:$0xff]
    %v59 = vld [vmem:[#allocation5 + $0x30] sm:$0xff]
    %v60 = vld [vmem:[#allocation5 + $0x38] sm:$0xff]
    %v61 = vld [vmem:[#allocation5 + $0x40] sm:$0xff]
    %v62 = vld [vmem:[#allocation5 + $0x48] sm:$0xff]
    %v63 = vld [vmem:[#allocation5 + $0x50] sm:$0xff]
    %v64 = vld [vmem:[#allocation5 + $0x58] sm:$0xff]
    %v65 = vld [vmem:[#allocation5 + $0x60] sm:$0xff]
    %v66 = vld [vmem:[#allocation5 + $0x68] sm:$0xff]
    %v67 = vld [vmem:[#allocation5 + $0x70] sm:$0xff]
    %v68 = vld [vmem:[#allocation5 + $0x78] sm:$0xff]
    %v69 = vld [vmem:[#allocation5 + $0x80] sm:$0xff]
    %v70 = vld [vmem:[#allocation5 + $0x88] sm:$0xff]
    %v71 = vld [vmem:[#allocation5 + $0x90] sm:$0xff]
    %v72 = vld [vmem:[#allocation5 + $0x98] sm:$0xff]
    %v73 = vld [vmem:[#allocation5 + $0xa0] sm:$0xff]
    %v74 = vld [vmem:[#allocation5 + $0xa8] sm:$0xff]
    %v75 = vld [vmem:[#allocation5 + $0xb0] sm:$0xff]
    %v76 = vld [vmem:[#allocation5 + $0xb8] sm:$0xff]
    %v77 = vld [vmem:[#allocation5 + $0xc0] sm:$0xff]
    %v78 = vld [vmem:[#allocation5 + $0xc8] sm:$0xff]
    %v79 = vld [vmem:[#allocation5 + $0xd0] sm:$0xff]
    %v80 = vld [vmem:[#allocation5 + $0xd8] sm:$0xff]
    %v81 = vld [vmem:[#allocation5 + $0xe0] sm:$0xff]
    %v82 = vld [vmem:[#allocation5 + $0xe8] sm:$0xff]
    %v83 = vld [vmem:[#allocation5 + $0xf0] sm:$0xff]
    %v84 = vld [vmem:[#allocation5 + $0xf8] sm:$0xff]
    %v85 = vld [vmem:[#allocation5 + $0x100] sm:$0xff]
    %v86 = vld [vmem:[#allocation5 + $0x108] sm:$0xff]
    %v87 = vld [vmem:[#allocation5 + $0x110] sm:$0xff]
    %v88 = vld [vmem:[#allocation5 + $0x118] sm:$0xff]
    %v89 = vld [vmem:[#allocation5 + $0x120] sm:$0xff]
    %v90 = vld [vmem:[#allocation5 + $0x128] sm:$0xff]
    %v91 = vld [vmem:[#allocation5 + $0x130] sm:$0xff]
    %v92 = vld [vmem:[#allocation5 + $0x138] sm:$0xff]
    %v93 = vld [vmem:[#allocation5 + $0x140] sm:$0xff]
    %v94 = vld [vmem:[#allocation5 + $0x148] sm:$0xff]
    %v95 = vld [vmem:[#allocation5 + $0x150] sm:$0xff]
    %v96 = vld [vmem:[#allocation5 + $0x158] sm:$0xff]
    %v97 = vld [vmem:[#allocation5 + $0x160] sm:$0xff]
    %v98 = vld [vmem:[#allocation5 + $0x168] sm:$0xff]
    %v99 = vld [vmem:[#allocation5 + $0x170] sm:$0xff]
    %v100 = vld [vmem:[#allocation5 + $0x178] sm:$0xff]
    %v101 = vld [vmem:[#allocation5 + $0x180] sm:$0xff]
    %v102 = vld [vmem:[#allocation5 + $0x188] sm:$0xff]
    %v103 = vld [vmem:[#allocation5 + $0x190] sm:$0xff]
    %v104 = vld [vmem:[#allocation5 + $0x198] sm:$0xff]
    %v105 = vld [vmem:[#allocation5 + $0x1a0] sm:$0xff]
    %v106 = vld [vmem:[#allocation5 + $0x1a8] sm:$0xff]
    %v107 = vld [vmem:[#allocation5 + $0x1b0] sm:$0xff]
    %v108 = vld [vmem:[#allocation5 + $0x1b8] sm:$0xff]
    %v109 = vld [vmem:[#allocation5 + $0x1c0] sm:$0xff]
    %v110 = vld [vmem:[#allocation5 + $0x1c8] sm:$0xff]
    %v111 = vld [vmem:[#allocation5 + $0x1d0] sm:$0xff]
    %v112 = vld [vmem:[#allocation5 + $0x1d8] sm:$0xff]
    %v113 = vld [vmem:[#allocation5 + $0x1e0] sm:$0xff]
    %v114 = vld [vmem:[#allocation5 + $0x1e8] sm:$0xff]
    %v115 = vld [vmem:[#allocation5 + $0x1f0] sm:$0xff]
    %v116 = vld [vmem:[#allocation5 + $0x1f8] sm:$0xff]
    %v117 = vld [vmem:[#allocation5 + $0x200] sm:$0xff]
    %v118 = vld [vmem:[#allocation5 + $0x208] sm:$0xff]
    %v119 = vld [vmem:[#allocation5 + $0x210] sm:$0xff]
    %v120 = vld [vmem:[#allocation5 + $0x218] sm:$0xff]
    %v121 = vld [vmem:[#allocation5 + $0x220] sm:$0xff]
    %v122 = vld [vmem:[#allocation5 + $0x228] sm:$0xff]
    %v123 = vld [vmem:[#allocation5 + $0x230] sm:$0xff]
    %v124 = vld [vmem:[#allocation5 + $0x238] sm:$0xff]
    %v125 = vld [vmem:[#allocation5 + $0x240] sm:$0xff]
    %v126 = vld [vmem:[#allocation5 + $0x248] sm:$0xff]
    %v127 = vld [vmem:[#allocation5 + $0x250] sm:$0xff]
    %v128 = vld [vmem:[#allocation5 + $0x258] sm:$0xff]
    %v129 = vld [vmem:[#allocation5 + $0x260] sm:$0xff]
    %v130 = vld [vmem:[#allocation5 + $0x268] sm:$0xff]
    %v131 = vld [vmem:[#allocation5 + $0x270] sm:$0xff]
    %v132 = vld [vmem:[#allocation5 + $0x278] sm:$0xff]
    %v133 = vld [vmem:[#allocation7] sm:$0xff]
    %v134 = vld [vmem:[#allocation7 + $0x8] sm:$0x3]
    %v137 = vlaneseq
    %v138 = vshrl.u32 %v137, 7
    %v139 = vsub.s32 0, %v138
    %v140 = vrot.slane %v133, %v139
    %v141 = vlaneseq
    %v142 = vshrl.u32 %v141, 7
    %v143 = vsub.s32 1, %v142
    %v144 = vrot.slane %v133, %v143
    %v145 = vlaneseq
    %v146 = vshrl.u32 %v145, 7
    %v147 = vsub.s32 2, %v146
    %v148 = vrot.slane %v133, %v147
    %v149 = vlaneseq
    %v150 = vshrl.u32 %v149, 7
    %v151 = vsub.s32 3, %v150
    %v152 = vrot.slane %v133, %v151
    %v153 = vlaneseq
    %v154 = vshrl.u32 %v153, 7
    %v155 = vsub.s32 4, %v154
    %v156 = vrot.slane %v133, %v155
    %v157 = vlaneseq
    %v158 = vshrl.u32 %v157, 7
    %v159 = vsub.s32 5, %v158
    %v160 = vrot.slane %v133, %v159
    %v161 = vlaneseq
    %v162 = vshrl.u32 %v161, 7
    %v163 = vsub.s32 6, %v162
    %v164 = vrot.slane %v133, %v163
    %v165 = vlaneseq
    %v166 = vshrl.u32 %v165, 7
    %v167 = vsub.s32 7, %v166
    %v168 = vrot.slane %v133, %v167
    %v169 = vlaneseq
    %v170 = vshrl.u32 %v169, 7
    %v171 = vsub.s32 0, %v170
    %v172 = vrot.slane %v134, %v171
    %v173 = vlaneseq
    %v174 = vshrl.u32 %v173, 7
    %v175 = vsub.s32 1, %v174
    %v176 = vrot.slane %v134, %v175
    %vm187 = vcmask 523264
    %v189 = vsel %vm187, %v52, 0
    %191 = vmatprep.subr.mxu0 0.0
    %192 = vmatpush1.msra.mxu0 0.0
    %193 = vmatprep.subr.mxu0 0.0
    %194 = vmatpush1.msra.mxu0 0.0
    %195 = vmatprep.subr.mxu0 0.0
    %196 = vmatpush1.msra.mxu0 0.0
    %197 = vmatprep.subr.mxu0 0.0
    %198 = vmatpush1.msra.mxu0 0.0
    %199 = vmatprep.subr.mxu0 0.0
    %200 = vmatpush1.msra.mxu0 0.0
    %201 = vmatprep.subr.mxu0 0.0
    %202 = vmatpush1.msra.mxu0 0.0
    %203 = vmatprep.subr.mxu0 0.0
    %204 = vmatpush1.msra.mxu0 0.0
    %205 = vmatprep.subr.mxu0 0.0
    %206 = vmatpush1.msra.mxu0 0.0
    %207 = vmatprep.subr.mxu0 %v124
    %208 = vmatpush1.msra.mxu0 %v123
    %209 = vmatprep.subr.mxu0 %v114
    %210 = vmatpush1.msra.mxu0 %v113
    %211 = vmatprep.subr.mxu0 %v104
    %212 = vmatpush1.msra.mxu0 %v103
    %213 = vmatprep.subr.mxu0 %v94
    %214 = vmatpush1.msra.mxu0 %v93
    %215 = vmatprep.subr.mxu0 %v84
    %216 = vmatpush1.msra.mxu0 %v83
    %217 = vmatprep.subr.mxu0 %v74
    %218 = vmatpush1.msra.mxu0 %v73
    %219 = vmatprep.subr.mxu0 %v64
    %220 = vmatpush1.msra.mxu0 %v63
    %221 = vmatprep.subr.mxu0 %v54
    %222 = vmatpush1.msra.mxu0 %v53
    %223 = vmatprep.subr.mxu0 0.0
    %224 = vmatpush2.msra.mxu0 0.0
    %225 = vmatprep.subr.mxu0 0.0
    %226 = vmatpush2.msra.mxu0 0.0
    %227 = vmatprep.subr.mxu0 0.0
    %228 = vmatpush2.msra.mxu0 0.0
    %229 = vmatprep.subr.mxu0 0.0
    %230 = vmatpush2.msra.mxu0 0.0
    %231 = vmatprep.subr.mxu0 0.0
    %232 = vmatpush2.msra.mxu0 0.0
    %233 = vmatprep.subr.mxu0 0.0
    %234 = vmatpush2.msra.mxu0 0.0
    %235 = vmatprep.subr.mxu0 0.0
    %236 = vmatpush2.msra.mxu0 0.0
    %237 = vmatprep.subr.mxu0 0.0
    %238 = vmatpush2.msra.mxu0 0.0
    %239 = vmatprep.subr.mxu0 0.0
    %240 = vmatpush2.msra.mxu0 0.0
    %241 = vmatprep.subr.mxu0 0.0
    %242 = vmatpush2.msra.mxu0 0.0
    %243 = vmatprep.subr.mxu0 0.0
    %244 = vmatpush2.msra.mxu0 0.0
    %245 = vmatprep.subr.mxu0 0.0
    %246 = vmatpush2.msra.mxu0 0.0
    %247 = vmatprep.subr.mxu0 0.0
    %248 = vmatpush2.msra.mxu0 0.0
    %249 = vmatprep.subr.mxu0 0.0
    %250 = vmatpush2.msra.mxu0 0.0
    %251 = vmatprep.subr.mxu0 0.0
    %252 = vmatpush2.msra.mxu0 0.0
    %253 = vmatprep.subr.mxu0 0.0
    %254 = vmatpush2.msra.mxu0 0.0
    %255 = vmatprep.mubr.f32.mxu0 0.0
    %256 = vmatmul.mubr.f32.gmra.mxu0 %v189
    %v257 = vpop.f32.mrf.mxu0
    %v258 = vadd.f32 %v140, %v257
    %v259 = vpop.f32.mrf.mxu0
    %v260 = vadd.f32 %v144, %v259
    %261 = vdwg.mxu0
    %262 = vmatprep.subr.mxu0 0.0
    %263 = vmatpush1.msra.mxu0 0.0
    %264 = vmatprep.subr.mxu0 0.0
    %265 = vmatpush1.msra.mxu0 0.0
    %266 = vmatprep.subr.mxu0 0.0
    %267 = vmatpush1.msra.mxu0 0.0
    %268 = vmatprep.subr.mxu0 0.0
    %269 = vmatpush1.msra.mxu0 0.0
    %270 = vmatprep.subr.mxu0 0.0
    %271 = vmatpush1.msra.mxu0 0.0
    %272 = vmatprep.subr.mxu0 0.0
    %273 = vmatpush1.msra.mxu0 0.0
    %274 = vmatprep.subr.mxu0 0.0
    %275 = vmatpush1.msra.mxu0 0.0
    %276 = vmatprep.subr.mxu0 0.0
    %277 = vmatpush1.msra.mxu0 0.0
    %278 = vmatprep.subr.mxu0 %v126
    %279 = vmatpush1.msra.mxu0 %v125
    %280 = vmatprep.subr.mxu0 %v116
    %281 = vmatpush1.msra.mxu0 %v115
    %282 = vmatprep.subr.mxu0 %v106
    %283 = vmatpush1.msra.mxu0 %v105
    %284 = vmatprep.subr.mxu0 %v96
    %285 = vmatpush1.msra.mxu0 %v95
    %286 = vmatprep.subr.mxu0 %v86
    %287 = vmatpush1.msra.mxu0 %v85
    %288 = vmatprep.subr.mxu0 %v76
    %289 = vmatpush1.msra.mxu0 %v75
    %290 = vmatprep.subr.mxu0 %v66
    %291 = vmatpush1.msra.mxu0 %v65
    %292 = vmatprep.subr.mxu0 %v56
    %293 = vmatpush1.msra.mxu0 %v55
    %294 = vmatprep.subr.mxu0 0.0
    %295 = vmatpush2.msra.mxu0 0.0
    %296 = vmatprep.subr.mxu0 0.0
    %297 = vmatpush2.msra.mxu0 0.0
    %298 = vmatprep.subr.mxu0 0.0
    %299 = vmatpush2.msra.mxu0 0.0
    %300 = vmatprep.subr.mxu0 0.0
    %301 = vmatpush2.msra.mxu0 0.0
    %302 = vmatprep.subr.mxu0 0.0
    %303 = vmatpush2.msra.mxu0 0.0
    %304 = vmatprep.subr.mxu0 0.0
    %305 = vmatpush2.msra.mxu0 0.0
    %306 = vmatprep.subr.mxu0 0.0
    %307 = vmatpush2.msra.mxu0 0.0
    %308 = vmatprep.subr.mxu0 0.0
    %309 = vmatpush2.msra.mxu0 0.0
    %310 = vmatprep.subr.mxu0 0.0
    %311 = vmatpush2.msra.mxu0 0.0
    %312 = vmatprep.subr.mxu0 0.0
    %313 = vmatpush2.msra.mxu0 0.0
    %314 = vmatprep.subr.mxu0 0.0
    %315 = vmatpush2.msra.mxu0 0.0
    %316 = vmatprep.subr.mxu0 0.0
    %317 = vmatpush2.msra.mxu0 0.0
    %318 = vmatprep.subr.mxu0 0.0
    %319 = vmatpush2.msra.mxu0 0.0
    %320 = vmatprep.subr.mxu0 0.0
    %321 = vmatpush2.msra.mxu0 0.0
    %322 = vmatprep.subr.mxu0 0.0
    %323 = vmatpush2.msra.mxu0 0.0
    %324 = vmatprep.subr.mxu0 0.0
    %325 = vmatpush2.msra.mxu0 0.0
    %326 = vmatprep.mubr.f32.mxu0 0.0
    %327 = vmatmul.mubr.f32.gmra.mxu0 %v189
    %v328 = vpop.f32.mrf.mxu0
    %v329 = vadd.f32 %v148, %v328
    %v330 = vpop.f32.mrf.mxu0
    %v331 = vadd.f32 %v152, %v330
    %332 = vdwg.mxu0
    %333 = vmatprep.subr.mxu0 0.0
    %334 = vmatpush1.msra.mxu0 0.0
    %335 = vmatprep.subr.mxu0 0.0
    %336 = vmatpush1.msra.mxu0 0.0
    %337 = vmatprep.subr.mxu0 0.0
    %338 = vmatpush1.msra.mxu0 0.0
    %339 = vmatprep.subr.mxu0 0.0
    %340 = vmatpush1.msra.mxu0 0.0
    %341 = vmatprep.subr.mxu0 0.0
    %342 = vmatpush1.msra.mxu0 0.0
    %343 = vmatprep.subr.mxu0 0.0
    %344 = vmatpush1.msra.mxu0 0.0
    %345 = vmatprep.subr.mxu0 0.0
    %346 = vmatpush1.msra.mxu0 0.0
    %347 = vmatprep.subr.mxu0 0.0
    %348 = vmatpush1.msra.mxu0 0.0
    %349 = vmatprep.subr.mxu0 %v128
    %350 = vmatpush1.msra.mxu0 %v127
    %351 = vmatprep.subr.mxu0 %v118
    %352 = vmatpush1.msra.mxu0 %v117
    %353 = vmatprep.subr.mxu0 %v108
    %354 = vmatpush1.msra.mxu0 %v107
    %355 = vmatprep.subr.mxu0 %v98
    %356 = vmatpush1.msra.mxu0 %v97
    %357 = vmatprep.subr.mxu0 %v88
    %358 = vmatpush1.msra.mxu0 %v87
    %359 = vmatprep.subr.mxu0 %v78
    %360 = vmatpush1.msra.mxu0 %v77
    %361 = vmatprep.subr.mxu0 %v68
    %362 = vmatpush1.msra.mxu0 %v67
    %363 = vmatprep.subr.mxu0 %v58
    %364 = vmatpush1.msra.mxu0 %v57
    %365 = vmatprep.subr.mxu0 0.0
    %366 = vmatpush2.msra.mxu0 0.0
    %367 = vmatprep.subr.mxu0 0.0
    %368 = vmatpush2.msra.mxu0 0.0
    %369 = vmatprep.subr.mxu0 0.0
    %370 = vmatpush2.msra.mxu0 0.0
    %371 = vmatprep.subr.mxu0 0.0
    %372 = vmatpush2.msra.mxu0 0.0
    %373 = vmatprep.subr.mxu0 0.0
    %374 = vmatpush2.msra.mxu0 0.0
    %375 = vmatprep.subr.mxu0 0.0
    %376 = vmatpush2.msra.mxu0 0.0
    %377 = vmatprep.subr.mxu0 0.0
    %378 = vmatpush2.msra.mxu0 0.0
    %379 = vmatprep.subr.mxu0 0.0
    %380 = vmatpush2.msra.mxu0 0.0
    %381 = vmatprep.subr.mxu0 0.0
    %382 = vmatpush2.msra.mxu0 0.0
    %383 = vmatprep.subr.mxu0 0.0
    %384 = vmatpush2.msra.mxu0 0.0
    %385 = vmatprep.subr.mxu0 0.0
    %386 = vmatpush2.msra.mxu0 0.0
    %387 = vmatprep.subr.mxu0 0.0
    %388 = vmatpush2.msra.mxu0 0.0
    %389 = vmatprep.subr.mxu0 0.0
    %390 = vmatpush2.msra.mxu0 0.0
    %391 = vmatprep.subr.mxu0 0.0
    %392 = vmatpush2.msra.mxu0 0.0
    %393 = vmatprep.subr.mxu0 0.0
    %394 = vmatpush2.msra.mxu0 0.0
    %395 = vmatprep.subr.mxu0 0.0
    %396 = vmatpush2.msra.mxu0 0.0
    %397 = vmatprep.mubr.f32.mxu0 0.0
    %398 = vmatmul.mubr.f32.gmra.mxu0 %v189
    %v399 = vpop.f32.mrf.mxu0
    %v400 = vadd.f32 %v156, %v399
    %v401 = vpop.f32.mrf.mxu0
    %v402 = vadd.f32 %v160, %v401
    %403 = vdwg.mxu0
    %404 = vmatprep.subr.mxu0 0.0
    %405 = vmatpush1.msra.mxu0 0.0
    %406 = vmatprep.subr.mxu0 0.0
    %407 = vmatpush1.msra.mxu0 0.0
    %408 = vmatprep.subr.mxu0 0.0
    %409 = vmatpush1.msra.mxu0 0.0
    %410 = vmatprep.subr.mxu0 0.0
    %411 = vmatpush1.msra.mxu0 0.0
    %412 = vmatprep.subr.mxu0 0.0
    %413 = vmatpush1.msra.mxu0 0.0
    %414 = vmatprep.subr.mxu0 0.0
    %415 = vmatpush1.msra.mxu0 0.0
    %416 = vmatprep.subr.mxu0 0.0
    %417 = vmatpush1.msra.mxu0 0.0
    %418 = vmatprep.subr.mxu0 0.0
    %419 = vmatpush1.msra.mxu0 0.0
    %420 = vmatprep.subr.mxu0 %v130
    %421 = vmatpush1.msra.mxu0 %v129
    %422 = vmatprep.subr.mxu0 %v120
    %423 = vmatpush1.msra.mxu0 %v119
    %424 = vmatprep.subr.mxu0 %v110
    %425 = vmatpush1.msra.mxu0 %v109
    %426 = vmatprep.subr.mxu0 %v100
    %427 = vmatpush1.msra.mxu0 %v99
    %428 = vmatprep.subr.mxu0 %v90
    %429 = vmatpush1.msra.mxu0 %v89
    %430 = vmatprep.subr.mxu0 %v80
    %431 = vmatpush1.msra.mxu0 %v79
    %432 = vmatprep.subr.mxu0 %v70
    %433 = vmatpush1.msra.mxu0 %v69
    %434 = vmatprep.subr.mxu0 %v60
    %435 = vmatpush1.msra.mxu0 %v59
    %436 = vmatprep.subr.mxu0 0.0
    %437 = vmatpush2.msra.mxu0 0.0
    %438 = vmatprep.subr.mxu0 0.0
    %439 = vmatpush2.msra.mxu0 0.0
    %440 = vmatprep.subr.mxu0 0.0
    %441 = vmatpush2.msra.mxu0 0.0
    %442 = vmatprep.subr.mxu0 0.0
    %443 = vmatpush2.msra.mxu0 0.0
    %444 = vmatprep.subr.mxu0 0.0
    %445 = vmatpush2.msra.mxu0 0.0
    %446 = vmatprep.subr.mxu0 0.0
    %447 = vmatpush2.msra.mxu0 0.0
    %448 = vmatprep.subr.mxu0 0.0
    %449 = vmatpush2.msra.mxu0 0.0
    %450 = vmatprep.subr.mxu0 0.0
    %451 = vmatpush2.msra.mxu0 0.0
    %452 = vmatprep.subr.mxu0 0.0
    %453 = vmatpush2.msra.mxu0 0.0
    %454 = vmatprep.subr.mxu0 0.0
    %455 = vmatpush2.msra.mxu0 0.0
    %456 = vmatprep.subr.mxu0 0.0
    %457 = vmatpush2.msra.mxu0 0.0
    %458 = vmatprep.subr.mxu0 0.0
    %459 = vmatpush2.msra.mxu0 0.0
    %460 = vmatprep.subr.mxu0 0.0
    %461 = vmatpush2.msra.mxu0 0.0
    %462 = vmatprep.subr.mxu0 0.0
    %463 = vmatpush2.msra.mxu0 0.0
    %464 = vmatprep.subr.mxu0 0.0
    %465 = vmatpush2.msra.mxu0 0.0
    %466 = vmatprep.subr.mxu0 0.0
    %467 = vmatpush2.msra.mxu0 0.0
    %468 = vmatprep.mubr.f32.mxu0 0.0
    %469 = vmatmul.mubr.f32.gmra.mxu0 %v189
    %v470 = vpop.f32.mrf.mxu0
    %v471 = vadd.f32 %v164, %v470
    %v472 = vpop.f32.mrf.mxu0
    %v473 = vadd.f32 %v168, %v472
    %474 = vdwg.mxu0
    %475 = vmatprep.subr.mxu0 0.0
    %476 = vmatpush1.msra.mxu0 0.0
    %477 = vmatprep.subr.mxu0 0.0
    %478 = vmatpush1.msra.mxu0 0.0
    %479 = vmatprep.subr.mxu0 0.0
    %480 = vmatpush1.msra.mxu0 0.0
    %481 = vmatprep.subr.mxu0 0.0
    %482 = vmatpush1.msra.mxu0 0.0
    %483 = vmatprep.subr.mxu0 0.0
    %484 = vmatpush1.msra.mxu0 0.0
    %485 = vmatprep.subr.mxu0 0.0
    %486 = vmatpush1.msra.mxu0 0.0
    %487 = vmatprep.subr.mxu0 0.0
    %488 = vmatpush1.msra.mxu0 0.0
    %489 = vmatprep.subr.mxu0 0.0
    %490 = vmatpush1.msra.mxu0 0.0
    %491 = vmatprep.subr.mxu0 %v132
    %492 = vmatpush1.msra.mxu0 %v131
    %493 = vmatprep.subr.mxu0 %v122
    %494 = vmatpush1.msra.mxu0 %v121
    %495 = vmatprep.subr.mxu0 %v112
    %496 = vmatpush1.msra.mxu0 %v111
    %497 = vmatprep.subr.mxu0 %v102
    %498 = vmatpush1.msra.mxu0 %v101
    %499 = vmatprep.subr.mxu0 %v92
    %500 = vmatpush1.msra.mxu0 %v91
    %501 = vmatprep.subr.mxu0 %v82
    %502 = vmatpush1.msra.mxu0 %v81
    %503 = vmatprep.subr.mxu0 %v72
    %504 = vmatpush1.msra.mxu0 %v71
    %505 = vmatprep.subr.mxu0 %v62
    %506 = vmatpush1.msra.mxu0 %v61
    %507 = vmatprep.subr.mxu0 0.0
    %508 = vmatpush2.msra.mxu0 0.0
    %509 = vmatprep.subr.mxu0 0.0
    %510 = vmatpush2.msra.mxu0 0.0
    %511 = vmatprep.subr.mxu0 0.0
    %512 = vmatpush2.msra.mxu0 0.0
    %513 = vmatprep.subr.mxu0 0.0
    %514 = vmatpush2.msra.mxu0 0.0
    %515 = vmatprep.subr.mxu0 0.0
    %516 = vmatpush2.msra.mxu0 0.0
    %517 = vmatprep.subr.mxu0 0.0
    %518 = vmatpush2.msra.mxu0 0.0
    %519 = vmatprep.subr.mxu0 0.0
    %520 = vmatpush2.msra.mxu0 0.0
    %521 = vmatprep.subr.mxu0 0.0
    %522 = vmatpush2.msra.mxu0 0.0
    %523 = vmatprep.subr.mxu0 0.0
    %524 = vmatpush2.msra.mxu0 0.0
    %525 = vmatprep.subr.mxu0 0.0
    %526 = vmatpush2.msra.mxu0 0.0
    %527 = vmatprep.subr.mxu0 0.0
    %528 = vmatpush2.msra.mxu0 0.0
    %529 = vmatprep.subr.mxu0 0.0
    %530 = vmatpush2.msra.mxu0 0.0
    %531 = vmatprep.subr.mxu0 0.0
    %532 = vmatpush2.msra.mxu0 0.0
    %533 = vmatprep.subr.mxu0 0.0
    %534 = vmatpush2.msra.mxu0 0.0
    %535 = vmatprep.subr.mxu0 0.0
    %536 = vmatpush2.msra.mxu0 0.0
    %537 = vmatprep.subr.mxu0 0.0
    %538 = vmatpush2.msra.mxu0 0.0
    %539 = vmatprep.mubr.f32.mxu0 0.0
    %540 = vmatmul.mubr.f32.gmra.mxu0 %v189
    %v541 = vpop.f32.mrf.mxu0
    %v542 = vadd.f32 %v172, %v541
    %v543 = vpop.f32.mrf.mxu0
    %v544 = vadd.f32 %v176, %v543
    %545 = vdwg.mxu0
    %v546 = vxor.u32 %v258, 2147483648
    %v547 = vxor.u32 %v260, 2147483648
    %v548 = vxor.u32 %v329, 2147483648
    %v549 = vxor.u32 %v331, 2147483648
    %v550 = vxor.u32 %v400, 2147483648
    %v551 = vxor.u32 %v402, 2147483648
    %v552 = vxor.u32 %v471, 2147483648
    %v553 = vxor.u32 %v473, 2147483648
    %v554 = vxor.u32 %v542, 2147483648
    %v555 = vxor.u32 %v544, 2147483648
    %v556 = vmul.f32 %v546, 1.442695
    %v557 = vpow.pop %v556
    %v558 = vmul.f32 %v547, 1.442695
    %v559 = vpow.pop %v558
    %v560 = vmul.f32 %v548, 1.442695
    %v561 = vpow.pop %v560
    %v562 = vmul.f32 %v549, 1.442695
    %v563 = vpow.pop %v562
    %v564 = vmul.f32 %v550, 1.442695
    %v565 = vpow.pop %v564
    %v566 = vmul.f32 %v551, 1.442695
    %v567 = vpow.pop %v566
    %v568 = vmul.f32 %v552, 1.442695
    %v569 = vpow.pop %v568
    %v570 = vmul.f32 %v553, 1.442695
    %v571 = vpow.pop %v570
    %v572 = vmul.f32 %v554, 1.442695
    %v573 = vpow.pop %v572
    %v574 = vmul.f32 %v555, 1.442695
    %v575 = vpow.pop %v574
    %v576 = vadd.f32 %v557, 1.0
    %v577 = vadd.f32 %v559, 1.0
    %v578 = vadd.f32 %v561, 1.0
    %v579 = vadd.f32 %v563, 1.0
    %v580 = vadd.f32 %v565, 1.0
    %v581 = vadd.f32 %v567, 1.0
    %v582 = vadd.f32 %v569, 1.0
    %v583 = vadd.f32 %v571, 1.0
    %v584 = vadd.f32 %v573, 1.0
    %v585 = vadd.f32 %v575, 1.0
    %v586 = vrcp.pop %v576
    %v587 = vmul.f32 1.0, %v586
    %v588 = vrcp.pop %v577
    %v589 = vmul.f32 1.0, %v588
    %v590 = vrcp.pop %v578
    %v591 = vmul.f32 1.0, %v590
    %v592 = vrcp.pop %v579
    %v593 = vmul.f32 1.0, %v592
    %v594 = vrcp.pop %v580
    %v595 = vmul.f32 1.0, %v594
    %v596 = vrcp.pop %v581
    %v597 = vmul.f32 1.0, %v596
    %v598 = vrcp.pop %v582
    %v599 = vmul.f32 1.0, %v598
    %v600 = vrcp.pop %v583
    %v601 = vmul.f32 1.0, %v600
    %v602 = vrcp.pop %v584
    %v603 = vmul.f32 1.0, %v602
    %v604 = vrcp.pop %v585
    %v605 = vmul.f32 1.0, %v604
    %v616 = vcombine.low %v587, %v589
    %v617 = vcombine.low %v591, %v593
    %v618 = vcombine.low %v595, %v597
    %v619 = vcombine.low %v599, %v601
    %v621 = vunpack.c.l.s4 1966171168
    %v622 = vunpack.c.0.s8 %v621
    %v623 = vlaneseq
    %v624 = vshrl.u32 %v623, 7
    %v625 = vsub.s32 %v622, %v624
    %v626 = vrot.slane %v616, %v625
    %v628 = vunpack.c.l.s4 1966171168
    %v629 = vunpack.c.0.s8 %v628
    %v630 = vlaneseq
    %v631 = vshrl.u32 %v630, 7
    %v632 = vsub.s32 %v629, %v631
    %v633 = vrot.slane %v617, %v632
    %v635 = vunpack.c.l.s4 1966171168
    %v636 = vunpack.c.0.s8 %v635
    %v637 = vlaneseq
    %v638 = vshrl.u32 %v637, 7
    %v639 = vsub.s32 %v636, %v638
    %v640 = vrot.slane %v618, %v639
    %v642 = vunpack.c.l.s4 1966171168
    %v643 = vunpack.c.0.s8 %v642
    %v644 = vlaneseq
    %v645 = vshrl.u32 %v644, 7
    %v646 = vsub.s32 %v643, %v645
    %v647 = vrot.slane %v619, %v646
    %v648 = vcombine.low %v626, %v633
    %v649 = vcombine.low %v640, %v647
    %v651 = vunpack.c.l.s4 1966171168
    %v652 = vunpack.c.0.s8 %v651
    %v653 = vlaneseq
    %v654 = vshrl.u32 %v653, 7
    %v655 = vsub.s32 %v652, %v654
    %v656 = vrot.slane %v648, %v655
    %v658 = vunpack.c.l.s4 1966171168
    %v659 = vunpack.c.0.s8 %v658
    %v660 = vlaneseq
    %v661 = vshrl.u32 %v660, 7
    %v662 = vsub.s32 %v659, %v661
    %v663 = vrot.slane %v649, %v662
    %v664 = vcombine.low %v656, %v663
    %v665 = vcombine.low %v603, %v605
    %v667 = vunpack.c.l.s4 1966171168
    %v668 = vunpack.c.0.s8 %v667
    %v669 = vlaneseq
    %v670 = vshrl.u32 %v669, 7
    %v671 = vsub.s32 %v668, %v670
    %v672 = vrot.slane %v665, %v671
    %v674 = vunpack.c.l.s4 1966171168
    %v675 = vunpack.c.0.s8 %v674
    %v676 = vlaneseq
    %v677 = vshrl.u32 %v676, 7
    %v678 = vsub.s32 %v675, %v677
    %v679 = vrot.slane %v672, %v678
    %682 = vst [vmem:[#allocation8] sm:$0xff] %v664
    %v683 = vlaneseq
    %vm684 = vcmp.ge.s32.totalorder %v683, 0
    %vm685 = vcmp.lt.s32.totalorder %v683, 256
    %vm686 = vmand %vm684, %vm685
    %687 = vst.msk [vmem:[#allocation8 + $0x8] sm:$0x3] %vm686, %v679
    // Predicated region
    $region26: #{tpu_custom_call.1} parent=1 // pred_check
      _
    $region27: #{tpu_custom_call.1} parent=1 // pred_check_branch
      %689 = sbr.rel (0) target = $region29
    $region28: #{tpu_custom_call.1} parent=1 // pred_region
      %s691 = ssub.s32 160, 160
      %692 = vsyncadd [#allocation4], %s691
      %s694 = sshll.u32 [#allocation8], 4
      %s695 = int_to_ptr.vmem [resolvable:$true] %s694
      %697 = dma.vmem_to_hbm [thread:$0]  %s695, 160, %s3, [#allocation4]
    $region29: #{tpu_custom_call.1} parent=1 // pred_fallthru
      _
    // Predicated region
    $region30: #{tpu_custom_call.1} parent=1 // pred_check
      _
    $region31: #{tpu_custom_call.1} parent=1 // pred_check_branch
      %699 = sbr.rel (0) target = $region33
    $region32: #{tpu_custom_call.1} parent=1 // pred_region
      %700 = dma.done [#allocation4], 160
    $region33: #{tpu_custom_call.1} parent=1 // pred_fallthru
      _
    %701 = vsyncpa [#allocation3], 1
    %702 = vsyncpa [#allocation6], 1
    %703 = vsyncpa [#allocation4], 1

</llo_original>
